<compile_context>
chip_gen: v5e
topology: v5e:2x2
jax: 0.10.0
libtpu: 0.0.40
codegen_flags: <defaults>
</compile_context>

<pallas_src>
import functools

import jax
import jax.numpy as jnp
from jax import lax
from jax.experimental import pallas as pl
from jax.experimental.pallas import tpu as pltpu


# --------------------------------------------------------------------------
# Helpers
# --------------------------------------------------------------------------

def _round_up(v, m):
    return ((v + m - 1) // m) * m


def _pick_tile(n_pad, cap=4096):
    """Largest multiple of 128 (<= cap) that divides n_pad."""
    t = min(n_pad, cap)
    t -= t % 128
    while t > 128 and n_pad % t != 0:
        t -= 128
    return t


# --------------------------------------------------------------------------
# Fused kernel
# --------------------------------------------------------------------------

def autorec_kernel(x_ref, w1t_ref, b1_ref, w2_ref, b2_ref, o_ref,
                   hacc_ref, hbf_ref):
    """Grid = (2, nt).  phase 0: h += x_tile @ W1^T_tile (item reduction).
    phase 1: finalize h once (bias+ReLU, bf16), then per item tile:
             y_tile = h_bf16 @ W2_tile^T + b2_tile (lane-dense output)."""
    phase = pl.program_id(0)
    j = pl.program_id(1)

    @pl.when((phase == 0) & (j == 0))
    def _init():
        hacc_ref[...] = jnp.zeros_like(hacc_ref)

    @pl.when(phase == 0)
    def _encode():
        hacc_ref[...] += jnp.dot(
            x_ref[...].astype(jnp.bfloat16),          # per-tile VPU cast (no wrapper pass)
            w1t_ref[...],
            preferred_element_type=jnp.float32)

    @pl.when(phase == 1)
    def _decode():
        @pl.when(j == 0)
        def _finalize_h():
            hbf_ref[...] = jnp.maximum(
                hacc_ref[...] + b1_ref[...], 0.0).astype(jnp.bfloat16)

        # W2 stored row-major (n_pad, hidden): contract over hidden (NT matmul)
        # so the streamed (tn, hidden) block is fully contiguous in HBM.
        y = lax.dot_general(
            hbf_ref[...], w2_ref[...],
            dimension_numbers=(((1,), (1,)), ((), ())),
            preferred_element_type=jnp.float32)
        o_ref[...] = (y + b2_ref[...]).astype(o_ref.dtype)


# --------------------------------------------------------------------------
# Wrapper
# --------------------------------------------------------------------------

@functools.partial(jax.jit, static_argnames=("tile_items",))
def autorec_forward(x, w1t, b1, w2, b2, *, tile_items=None):
    """AutoRec forward: relu(x @ W1^T + b1) @ W2^T + b2.

    x:   (B, num_items)        float32
    w1t: (n_pad, hidden)       bfloat16  (enc weight, pre-transposed, pre-padded)
    b1:  (1, hidden)           float32
    w2:  (n_pad, hidden)       bfloat16  (dec weight, PyTorch layout, pre-padded)
    b2:  (1, n_pad)            float32   (pre-padded)
    Returns (B, num_items) float32.
    """
    B, num_items = x.shape
    n_pad, hidden = w1t.shape
    out_dtype = x.dtype

    # Only x is padded per call (weights were padded once at init).
    if n_pad != num_items:
        x = jnp.pad(x, ((0, 0), (0, n_pad - num_items)))

    tn = tile_items if tile_items is not None else _pick_tile(n_pad)
    assert tn % 128 == 0 and n_pad % tn == 0, (tn, n_pad)
    nt = n_pad // tn
    last = nt - 1

    cost = pl.CostEstimate(
        flops=4 * B * n_pad * hidden,
        transcendentals=0,
        bytes_accessed=(x.size * 4 + w1t.size * 2 + w2.size * 2
                        + b1.size * 4 + b2.size * 4 + B * n_pad * 4),
    )

    y = pl.pallas_call(
        autorec_kernel,
        out_shape=jax.ShapeDtypeStruct((B, n_pad), out_dtype),
        grid=(2, nt),
        in_specs=[
            # x item tile: streamed in phase 0, parked at the last tile in phase 1.
            pl.BlockSpec((B, tn), lambda p, j: (0, j * (1 - p) + last * p)),
            # W1^T item tile: streamed in phase 0, parked in phase 1 (no re-DMA).
            pl.BlockSpec((tn, hidden), lambda p, j: (j * (1 - p) + last * p, 0)),
            # b1: tiny, resident.
            pl.BlockSpec((1, hidden), lambda p, j: (0, 0)),
            # W2 item tile: parked at tile 0 in phase 0, streamed in phase 1.
            pl.BlockSpec((tn, hidden), lambda p, j: (j * p, 0)),
            # b2 item tile.
            pl.BlockSpec((1, tn), lambda p, j: (0, j * p)),
        ],
        # Output tile: held at block 0 during phase 0 (never flushed mid-run),
        # lane-dense streamed writes during phase 1.
        out_specs=pl.BlockSpec((B, tn), lambda p, j: (0, j * p)),
        scratch_shapes=[
            pltpu.VMEM((B, hidden), jnp.float32),    # h accumulator
            pltpu.VMEM((B, hidden), jnp.bfloat16),   # finalized relu(h) in bf16
        ],
        compiler_params=pltpu.CompilerParams(
            dimension_semantics=("arbitrary", "arbitrary"),
            vmem_limit_bytes=32 << 20,
        ),
        cost_estimate=cost,
    )(x, w1t, b1, w2, b2)

    if n_pad != num_items:
        y = y[:, :num_items]
    return y


# --------------------------------------------------------------------------
# Reference & init
# --------------------------------------------------------------------------

def autorec_reference(x, w1t, b1, w2, b2):
    """Same math/dtype path as the kernel (bf16 MXU inputs, f32 accumulation)."""
    n_pad = w1t.shape[0]
    B, num_items = x.shape
    xp = jnp.pad(x, ((0, 0), (0, n_pad - num_items))) if n_pad != num_items else x
    h = jnp.dot(xp.astype(jnp.bfloat16), w1t, preferred_element_type=jnp.float32)
    h = jnp.maximum(h + b1, 0.0).astype(jnp.bfloat16)
    y = lax.dot_general(h, w2, dimension_numbers=(((1,), (1,)), ((), ())),
                        preferred_element_type=jnp.float32) + b2
    return y[:, :num_items]


def init_params(key, num_items, hidden_units, *, max_tile=2048):
    """PyTorch nn.Linear default init (U(-1/sqrt(fan_in), 1/sqrt(fan_in))).

    Weights are pre-transposed (encoder), pre-padded to the lane-tile multiple
    and pre-cast to bf16 ONCE here, so the per-call forward does no weight
    transform and no per-call weight padding.
    """
    tile = min(max_tile, _round_up(num_items, 128))
    n_pad = _round_up(num_items, tile)

    k1, k2, k3, k4 = jax.random.split(key, 4)
    bound1 = 1.0 / (num_items ** 0.5)
    bound2 = 1.0 / (hidden_units ** 0.5)
    # enc_linear1.weight is (hidden, num_items); store its transpose.
    w1t = jax.random.uniform(k1, (num_items, hidden_units), jnp.float32,
                             -bound1, bound1)
    b1 = jax.random.uniform(k2, (1, hidden_units), jnp.float32, -bound1, bound1)
    # dec_linear1.weight is (num_items, hidden); keep PyTorch layout (contiguous tiles).
    w2 = jax.random.uniform(k3, (num_items, hidden_units), jnp.float32,
                            -bound2, bound2)
    b2 = jax.random.uniform(k4, (1, num_items), jnp.float32, -bound2, bound2)

    pad = n_pad - num_items
    if pad:
        w1t = jnp.pad(w1t, ((0, pad), (0, 0)))
        w2 = jnp.pad(w2, ((0, pad), (0, 0)))
        b2 = jnp.pad(b2, ((0, 0), (0, pad)))
    return w1t.astype(jnp.bfloat16), b1, w2.astype(jnp.bfloat16), b2


if __name__ == "__main__":
    # Small shapes consistent with the module: batch of 8 user rating rows,
    # num_items=1000 (non-multiple of 128 -> exercises one-time padding),
    # hidden_units=128.
    num_users = 8
    num_items = 1000
    hidden_units = 128

    key = jax.random.PRNGKey(0)
    kx, kp = jax.random.split(key)
    x = jax.random.uniform(kx, (num_users, num_items), jnp.float32, 0.0, 5.0)
    w1t, b1, w2, b2 = init_params(kp, num_items, hidden_units)

    # Multi-tile path (tn=256 -> 4 item tiles per phase).
    out = autorec_forward(x, w1t, b1, w2, b2, tile_items=256)
    out = jax.block_until_ready(out)
    # Auto-tiled path (picks the largest dividing tile, here tn=1024 -> nt=1).
    out_auto = jax.block_until_ready(autorec_forward(x, w1t, b1, w2, b2))

    ref = autorec_reference(x, w1t, b1, w2, b2)
    assert out.shape == (num_users, num_items)
    assert jnp.allclose(out, ref, atol=5e-3, rtol=5e-3), (
        f"mismatch vs reference, max abs diff = {jnp.max(jnp.abs(out - ref))}")
    assert jnp.allclose(out_auto, ref, atol=5e-3, rtol=5e-3), (
        f"auto-tile mismatch, max abs diff = {jnp.max(jnp.abs(out_auto - ref))}")

    print("KERNEL_OK")
</pallas_src>

<mosaic_0001>
module attributes {stable_mosaic.version = 11 : i64} {
  func.func @autorec_kernel(%arg0: i32, %arg1: i32, %arg2: memref<8x256xf32, #tpu.memory_space<vmem>>, %arg3: memref<256x128xbf16, #tpu.memory_space<vmem>>, %arg4: memref<1x128xf32, #tpu.memory_space<vmem>>, %arg5: memref<256x128xbf16, #tpu.memory_space<vmem>>, %arg6: memref<1x256xf32, #tpu.memory_space<vmem>>, %arg7: memref<8x256xf32, #tpu.memory_space<vmem>>, %arg8: memref<8x128xf32, #tpu.memory_space<vmem>>, %arg9: memref<8x128xbf16, #tpu.memory_space<vmem>>) attributes {dimension_semantics = [#tpu.dimension_semantics<arbitrary>, #tpu.dimension_semantics<arbitrary>], iteration_bounds = array<i64: 2, 4>, scalar_prefetch = 0 : i64, scratch_operands = 2 : i64, tpu.core_type = #tpu.core_type<tc>, window_params = [{transform_indices = @transform_0, window_bounds = array<i64: 8, 256>}, {transform_indices = @transform_1, window_bounds = array<i64: 256, 128>}, {pipeline_mode = #tpu.pipeline_mode<synchronous>, transform_indices = @transform_2, window_bounds = array<i64: 1, 128>}, {transform_indices = @transform_3, window_bounds = array<i64: 256, 128>}, {transform_indices = @transform_4, window_bounds = array<i64: 1, 256>}, {transform_indices = @transform_5, window_bounds = array<i64: 8, 256>}]} {
    %c0_i32 = arith.constant 0 : i32
    %0 = arith.cmpi eq, %arg0, %c0_i32 : i32
    %c0_i32_0 = arith.constant 0 : i32
    %1 = arith.cmpi eq, %arg1, %c0_i32_0 : i32
    %2 = arith.andi %0, %1 : i1
    %3 = arith.extui %2 : i1 to i32
    %c0_i32_1 = arith.constant 0 : i32
    %4 = arith.cmpi ne, %3, %c0_i32_1 : i32
    scf.if %4 {
      %cst = arith.constant 0.000000e+00 : f32
      %11 = vector.broadcast %cst : f32 to vector<8x128xf32>
      %c0 = arith.constant 0 : index
      %c0_5 = arith.constant 0 : index
      %12 = vector.load %arg8[%c0, %c0_5] : memref<8x128xf32, #tpu.memory_space<vmem>>, vector<8x128xf32>
      tpu.vector_store %arg8[%c0, %c0_5], %11 {strides = array<i32>} : memref<8x128xf32, #tpu.memory_space<vmem>>, vector<8x128xf32>,
    } else {
    }
    %c0_i32_2 = arith.constant 0 : i32
    %5 = arith.cmpi eq, %arg0, %c0_i32_2 : i32
    %6 = arith.extui %5 : i1 to i32
    %c0_i32_3 = arith.constant 0 : i32
    %7 = arith.cmpi ne, %6, %c0_i32_3 : i32
    scf.if %7 {
      %c0 = arith.constant 0 : index
      %c0_5 = arith.constant 0 : index
      %11 = vector.load %arg8[%c0, %c0_5] : memref<8x128xf32, #tpu.memory_space<vmem>>, vector<8x128xf32>
      %c0_6 = arith.constant 0 : index
      %c0_7 = arith.constant 0 : index
      %12 = vector.load %arg2[%c0_6, %c0_7] : memref<8x256xf32, #tpu.memory_space<vmem>>, vector<8x256xf32>
      %13 = arith.truncf %12 : vector<8x256xf32> to vector<8x256xbf16>
      %c0_8 = arith.constant 0 : index
      %c0_9 = arith.constant 0 : index
      %14 = vector.load %arg3[%c0_8, %c0_9] : memref<256x128xbf16, #tpu.memory_space<vmem>>, vector<256x128xbf16>
      %cst = arith.constant dense<0.000000e+00> : vector<8x128xf32>
      %15 = tpu.matmul %13, %14, %cst {dimension_numbers = #tpu.dot_dimension_numbers<[1], [0], [0], [1], [0, 0, 1, 1], [], []>} : vector<8x256xbf16>, vector<256x128xbf16>, vector<8x128xf32> -> vector<8x128xf32>
      %16 = arith.addf %11, %15 : vector<8x128xf32>
      %c0_10 = arith.constant 0 : index
      %c0_11 = arith.constant 0 : index
      %17 = vector.load %arg8[%c0_10, %c0_11] : memref<8x128xf32, #tpu.memory_space<vmem>>, vector<8x128xf32>
      tpu.vector_store %arg8[%c0_10, %c0_11], %16 {strides = array<i32>} : memref<8x128xf32, #tpu.memory_space<vmem>>, vector<8x128xf32>,
    } else {
    }
    %c1_i32 = arith.constant 1 : i32
    %8 = arith.cmpi eq, %arg0, %c1_i32 : i32
    %9 = arith.extui %8 : i1 to i32
    %c0_i32_4 = arith.constant 0 : i32
    %10 = arith.cmpi ne, %9, %c0_i32_4 : i32
    scf.if %10 {
      %c0_i32_5 = arith.constant 0 : i32
      %11 = arith.cmpi eq, %arg1, %c0_i32_5 : i32
      %12 = arith.extui %11 : i1 to i32
      %c0_i32_6 = arith.constant 0 : i32
      %13 = arith.cmpi ne, %12, %c0_i32_6 : i32
      scf.if %13 {
        %c0_14 = arith.constant 0 : index
        %c0_15 = arith.constant 0 : index
        %21 = vector.load %arg8[%c0_14, %c0_15] : memref<8x128xf32, #tpu.memory_space<vmem>>, vector<8x128xf32>
        %c0_16 = arith.constant 0 : index
        %c0_17 = arith.constant 0 : index
        %22 = vector.load %arg4[%c0_16, %c0_17] : memref<1x128xf32, #tpu.memory_space<vmem>>, vector<1x128xf32>
        %23 = vector.broadcast %22 : vector<1x128xf32> to vector<8x128xf32>
        %24 = arith.addf %21, %23 : vector<8x128xf32>
        %cst_18 = arith.constant 0.000000e+00 : f32
        %25 = vector.broadcast %cst_18 : f32 to vector<8x128xf32>
        %26 = arith.maximumf %24, %25 : vector<8x128xf32>
        %27 = arith.truncf %26 : vector<8x128xf32> to vector<8x128xbf16>
        %c0_19 = arith.constant 0 : index
        %c0_20 = arith.constant 0 : index
        %28 = vector.load %arg9[%c0_19, %c0_20] : memref<8x128xbf16, #tpu.memory_space<vmem>>, vector<8x128xbf16>
        tpu.vector_store %arg9[%c0_19, %c0_20], %27 {strides = array<i32>} : memref<8x128xbf16, #tpu.memory_space<vmem>>, vector<8x128xbf16>,
      } else {
      }
      %c0 = arith.constant 0 : index
      %c0_7 = arith.constant 0 : index
      %14 = vector.load %arg9[%c0, %c0_7] : memref<8x128xbf16, #tpu.memory_space<vmem>>, vector<8x128xbf16>
      %c0_8 = arith.constant 0 : index
      %c0_9 = arith.constant 0 : index
      %15 = vector.load %arg5[%c0_8, %c0_9] : memref<256x128xbf16, #tpu.memory_space<vmem>>, vector<256x128xbf16>
      %cst = arith.constant dense<0.000000e+00> : vector<8x256xf32>
      %16 = tpu.matmul %14, %15, %cst {dimension_numbers = #tpu.dot_dimension_numbers<[1], [1], [0], [0], [0, 0, 1, 0], [], []>} : vector<8x128xbf16>, vector<256x128xbf16>, vector<8x256xf32> -> vector<8x256xf32>
      %c0_10 = arith.constant 0 : index
      %c0_11 = arith.constant 0 : index
      %17 = vector.load %arg6[%c0_10, %c0_11] : memref<1x256xf32, #tpu.memory_space<vmem>>, vector<1x256xf32>
      %18 = vector.broadcast %17 : vector<1x256xf32> to vector<8x256xf32>
      %19 = arith.addf %16, %18 : vector<8x256xf32>
      %c0_12 = arith.constant 0 : index
      %c0_13 = arith.constant 0 : index
      %20 = vector.load %arg7[%c0_12, %c0_13] : memref<8x256xf32, #tpu.memory_space<vmem>>, vector<8x256xf32>
      tpu.vector_store %arg7[%c0_12, %c0_13], %19 {strides = array<i32>} : memref<8x256xf32, #tpu.memory_space<vmem>>, vector<8x256xf32>,
    } else {
    }
    return
  }
  func.func @transform_0(%arg0: i32, %arg1: i32) -> (i32, i32) {
    %c1_i32 = arith.constant 1 : i32
    %0 = arith.subi %c1_i32, %arg0 : i32
    %1 = arith.muli %arg1, %0 : i32
    %c3_i32 = arith.constant 3 : i32
    %2 = arith.muli %c3_i32, %arg0 : i32
    %3 = arith.addi %1, %2 : i32
    %c0_i32 = arith.constant 0 : i32
    %c0_i32_0 = arith.constant 0 : i32
    return %c0_i32, %3 : i32, i32
  }
  func.func @transform_1(%arg0: i32, %arg1: i32) -> (i32, i32) {
    %c1_i32 = arith.constant 1 : i32
    %0 = arith.subi %c1_i32, %arg0 : i32
    %1 = arith.muli %arg1, %0 : i32
    %c3_i32 = arith.constant 3 : i32
    %2 = arith.muli %c3_i32, %arg0 : i32
    %3 = arith.addi %1, %2 : i32
    %c0_i32 = arith.constant 0 : i32
    %c0_i32_0 = arith.constant 0 : i32
    return %3, %c0_i32 : i32, i32
  }
  func.func @transform_2(%arg0: i32, %arg1: i32) -> (i32, i32) {
    %c0_i32 = arith.constant 0 : i32
    %c0_i32_0 = arith.constant 0 : i32
    %c0_i32_1 = arith.constant 0 : i32
    return %c0_i32, %c0_i32_0 : i32, i32
  }
  func.func @transform_3(%arg0: i32, %arg1: i32) -> (i32, i32) {
    %0 = arith.muli %arg1, %arg0 : i32
    %c0_i32 = arith.constant 0 : i32
    %c0_i32_0 = arith.constant 0 : i32
    return %0, %c0_i32 : i32, i32
  }
  func.func @transform_4(%arg0: i32, %arg1: i32) -> (i32, i32) {
    %0 = arith.muli %arg1, %arg0 : i32
    %c0_i32 = arith.constant 0 : i32
    %c0_i32_0 = arith.constant 0 : i32
    return %c0_i32, %0 : i32, i32
  }
  func.func @transform_5(%arg0: i32, %arg1: i32) -> (i32, i32) {
    %0 = arith.muli %arg1, %arg0 : i32
    %c0_i32 = arith.constant 0 : i32
    %c0_i32_0 = arith.constant 0 : i32
    return %c0_i32, %0 : i32, i32
  }
}

</mosaic_0001>

<llo_original>
// kernel: autorec_forward.1
$region0: #{autorec_forward.1}
  #allocation0 [shape = 'u32[]', space=smem, size = 0x4, offset = 0x4, fixed_abs, tag = 'smem constant byte address 0x4 - core index']
  #allocation1 [shape = 'u32[72,128]{1,0:T(1,128)}', space=vmem, size = 0x9000, scoped, tag = 'internal scratch']
  #allocation2 [shape = 'f32[8,128]{1,0:T(8,128)}', space=vmem, size = 0x1000, scoped, tag = 'scratch operand']
  #allocation3 [shape = 'bf16[8,128]{1,0:T(8,128)(2,1)}', space=vmem, size = 0x800, scoped, tag = 'scratch operand']
  %s0 = inlined_call_operand.vmem [shape: f32[8,1024], index: 0, kind: input, shape index: {}]
  %s1 = inlined_call_operand.hbm [shape: bf16[1024,128], index: 1, kind: input, shape index: {}]
  %s2 = inlined_call_operand.vmem [shape: f32[1,128], index: 2, kind: input, shape index: {}]
  %s3 = inlined_call_operand.hbm [shape: bf16[1024,128], index: 3, kind: input, shape index: {}]
  %s4 = inlined_call_operand.vmem [shape: f32[1,1024], index: 4, kind: input, shape index: {}]
  %s5 = inlined_call_operand.hbm [shape: f32[8,1024], index: 5, kind: output, shape index: {}]
  %s6 = sld [smem:[#allocation0]]
  $region77: #{autorec_forward.1} parent=0
    _
  %s8 = ssub.s32 1, %s6
  %s9 = scalar_select 0, %s8, %s6
  $region1: #{autorec_forward.1} parent=0
    #allocation4 [shape = 'u8[131072]{0}', space=vmem, size = 0x20000, scoped, tag = 'input window, operand 1']
    #allocation5 [shape = 's32[2]{0}', space=sflag, size = 0x8, scoped, tag = 'scoped memory for autorec_forward.1']
    #allocation6 [shape = 's32[2]{0}', space=sflag, size = 0x8, scoped, tag = 'scoped memory for autorec_forward.1']
    #allocation7 [shape = 'u8[131072]{0}', space=vmem, size = 0x20000, scoped, tag = 'input window, operand 3']
    #allocation8 [shape = 's32[2]{0}', space=sflag, size = 0x8, scoped, tag = 'scoped memory for autorec_forward.1']
    #allocation9 [shape = 'u8[16384]{0}', space=vmem, size = 0x4000, scoped, tag = 'output window, operand 0']
    %10 = vsyncpa [#allocation5], 0
    %s11 = scalar_lea.sflag [#allocation5], 1
    %12 = vsyncpa %s11, 0
    %13 = vsyncpa [#allocation8], 0
    %s14 = scalar_lea.sflag [#allocation8], 1
    %15 = vsyncpa %s14, 0
    %16 = vsyncpa [#allocation6], 0
    %s17 = scalar_lea.sflag [#allocation6], 1
    %18 = vsyncpa %s17, 0
    loop: start=0, step=1, limit=10
    $region2: #{autorec_forward.1} parent=1 // loop_pre_header
      _
    $region3: #{autorec_forward.1} parent=1 // loop_header
      %s20 = sphi 0, %s24
      %p21 = scmp.ge.s32.totalorder %s20, 10
      %s27 = sphi 0, %s39
      %s28 = sphi 0, %s35
      %s29 = sphi 0, %s27
      %s30 = sphi 0, %s28
      %s31 = sphi 0, %s29
      %s32 = sphi 0, %s30
      %s50 = sphi 0, %s52
      %s53 = sphi 0, %s50
      %s54 = sphi 0, %s53
      %s70 = sphi 0, %s54
      %s84 = sphi 0, %s86
      %s87 = sphi 0, %s84
      %s88 = sphi 0, %s87
      %s104 = sphi 0, %s88
      %s108 = sphi 0, %s108
      %s110 = sphi 0, %s108
      %s111 = sphi 0, %s110
      %s125 = sphi 0, %s111
      %s133 = sphi 0, %s135
      %s136 = sphi 0, %s133
      %s137 = sphi 0, %s136
      %s153 = sphi 0, %s137
      %s161 = sphi 0, %s163
      %s164 = sphi 0, %s161
      %s165 = sphi 0, %s164
      %s181 = sphi 0, %s165
      %s189 = sphi 0, %s191
      %s192 = sphi 0, %s189
      %s193 = sphi 0, %s192
      %s209 = sphi 0, %s193
    $region4: #{autorec_forward.1} parent=1 // loop_header_branch
      %23 = sbr.rel (%p21) target = $region8
    $region5: #{autorec_forward.1} parent=1 // loop_body
      %s25 = ssub.s32 %s20, 1
      %s26 = ssub.s32 %s20, 2
      %s33 = sadd.s32 1, %s28
      %p34 = scmp.ge.s32.totalorder %s33, 4
      %s35 = scalar_select %p34, 0, %s33
      %s36 = sadd.s32 1, %s27
      %s37 = scalar_select %p34, %s36, %s27
      %p38 = scmp.ge.s32.totalorder %s37, 2
      %s39 = scalar_select %p38, 0, %s37
      %s40 = ssub.s32 1, %s27
      %s41 = smul.u32 %s28, %s40
      %s42 = smul.u32 %s27, 3
      %s43 = sadd.s32 %s41, %s42
      %s44 = ssub.s32 1, %s39
      %s45 = smul.u32 %s35, %s44
      %s46 = smul.u32 %s39, 3
      %s47 = sadd.s32 %s45, %s46
      %s48 = ssub.s32 %s43, %s47
      %p49 = scmp.eq.s32.totalorder %s48, 0
      %s51 = sadd.s32 %s50, 1
      %s52 = scalar_select %p49, %s50, %s51
      %p55 = pneg %p49
      %p56 = scmp.eq.s32.totalorder %s20, 7
      %p57 = por %p55, %p56
      %p58 = scmp.ne.s32.totalorder %s50, %s53
      %p59 = scmp.eq.s32.totalorder %s20, 0
      %p60 = por %p58, %p59
      %p61 = scmp.ne.s32.totalorder %s50, %s53
      %p62 = scmp.eq.s32.totalorder %s25, 7
      %p63 = por %p61, %p62
      %p64 = scmp.ne.s32.totalorder %s53, %s54
      %p65 = scmp.eq.s32.totalorder %s25, 0
      %p66 = por %p64, %p65
      %p67 = scmp.ne.s32.totalorder %s53, %s54
      %p68 = scmp.eq.s32.totalorder %s26, 7
      %p69 = por %p67, %p68
      %p71 = scmp.ne.s32.totalorder %s54, %s70
      %p72 = scmp.eq.s32.totalorder %s26, 0
      %p73 = por %p71, %p72
      %s74 = ssub.s32 1, %s27
      %s75 = smul.u32 %s28, %s74
      %s76 = smul.u32 %s27, 3
      %s77 = sadd.s32 %s75, %s76
      %s78 = ssub.s32 1, %s39
      %s79 = smul.u32 %s35, %s78
      %s80 = smul.u32 %s39, 3
      %s81 = sadd.s32 %s79, %s80
      %s82 = ssub.s32 %s77, %s81
      %p83 = scmp.eq.s32.totalorder %s82, 0
      %s85 = sadd.s32 %s84, 1
      %s86 = scalar_select %p83, %s84, %s85
      %p89 = pneg %p83
      %p90 = scmp.eq.s32.totalorder %s20, 7
      %p91 = por %p89, %p90
      %p92 = scmp.ne.s32.totalorder %s84, %s87
      %p93 = scmp.eq.s32.totalorder %s20, 0
      %p94 = por %p92, %p93
      %p95 = scmp.ne.s32.totalorder %s84, %s87
      %p96 = scmp.eq.s32.totalorder %s25, 7
      %p97 = por %p95, %p96
      %p98 = scmp.ne.s32.totalorder %s87, %s88
      %p99 = scmp.eq.s32.totalorder %s25, 0
      %p100 = por %p98, %p99
      %p101 = scmp.ne.s32.totalorder %s87, %s88
      %p102 = scmp.eq.s32.totalorder %s26, 7
      %p103 = por %p101, %p102
      %p105 = scmp.ne.s32.totalorder %s88, %s104
      %p106 = scmp.eq.s32.totalorder %s26, 0
      %p107 = por %p105, %p106
      %s109 = sadd.s32 %s108, 1
      %p112 = scmp.eq.s32.totalorder %s20, 7
      %p113 = scmp.ne.s32.totalorder %s108, %s110
      %p114 = scmp.eq.s32.totalorder %s20, 0
      %p115 = por %p113, %p114
      %p116 = scmp.ne.s32.totalorder %s108, %s110
      %p117 = scmp.eq.s32.totalorder %s25, 7
      %p118 = por %p116, %p117
      %p119 = scmp.ne.s32.totalorder %s110, %s111
      %p120 = scmp.eq.s32.totalorder %s25, 0
      %p121 = por %p119, %p120
      %p122 = scmp.ne.s32.totalorder %s110, %s111
      %p123 = scmp.eq.s32.totalorder %s26, 7
      %p124 = por %p122, %p123
      %p126 = scmp.ne.s32.totalorder %s111, %s125
      %p127 = scmp.eq.s32.totalorder %s26, 0
      %p128 = por %p126, %p127
      %s129 = smul.u32 %s28, %s27
      %s130 = smul.u32 %s35, %s39
      %s131 = ssub.s32 %s129, %s130
      %p132 = scmp.eq.s32.totalorder %s131, 0
      %s134 = sadd.s32 %s133, 1
      %s135 = scalar_select %p132, %s133, %s134
      %p138 = pneg %p132
      %p139 = scmp.eq.s32.totalorder %s20, 7
      %p140 = por %p138, %p139
      %p141 = scmp.ne.s32.totalorder %s133, %s136
      %p142 = scmp.eq.s32.totalorder %s20, 0
      %p143 = por %p141, %p142
      %p144 = scmp.ne.s32.totalorder %s133, %s136
      %p145 = scmp.eq.s32.totalorder %s25, 7
      %p146 = por %p144, %p145
      %p147 = scmp.ne.s32.totalorder %s136, %s137
      %p148 = scmp.eq.s32.totalorder %s25, 0
      %p149 = por %p147, %p148
      %p150 = scmp.ne.s32.totalorder %s136, %s137
      %p151 = scmp.eq.s32.totalorder %s26, 7
      %p152 = por %p150, %p151
      %p154 = scmp.ne.s32.totalorder %s137, %s153
      %p155 = scmp.eq.s32.totalorder %s26, 0
      %p156 = por %p154, %p155
      %s157 = smul.u32 %s28, %s27
      %s158 = smul.u32 %s35, %s39
      %s159 = ssub.s32 %s157, %s158
      %p160 = scmp.eq.s32.totalorder %s159, 0
      %s162 = sadd.s32 %s161, 1
      %s163 = scalar_select %p160, %s161, %s162
      %p166 = pneg %p160
      %p167 = scmp.eq.s32.totalorder %s20, 7
      %p168 = por %p166, %p167
      %p169 = scmp.ne.s32.totalorder %s161, %s164
      %p170 = scmp.eq.s32.totalorder %s20, 0
      %p171 = por %p169, %p170
      %p172 = scmp.ne.s32.totalorder %s161, %s164
      %p173 = scmp.eq.s32.totalorder %s25, 7
      %p174 = por %p172, %p173
      %p175 = scmp.ne.s32.totalorder %s164, %s165
      %p176 = scmp.eq.s32.totalorder %s25, 0
      %p177 = por %p175, %p176
      %p178 = scmp.ne.s32.totalorder %s164, %s165
      %p179 = scmp.eq.s32.totalorder %s26, 7
      %p180 = por %p178, %p179
      %p182 = scmp.ne.s32.totalorder %s165, %s181
      %p183 = scmp.eq.s32.totalorder %s26, 0
      %p184 = por %p182, %p183
      %s185 = smul.u32 %s28, %s27
      %s186 = smul.u32 %s35, %s39
      %s187 = ssub.s32 %s185, %s186
      %p188 = scmp.eq.s32.totalorder %s187, 0
      %s190 = sadd.s32 %s189, 1
      %s191 = scalar_select %p188, %s189, %s190
      %p194 = pneg %p188
      %p195 = scmp.eq.s32.totalorder %s20, 7
      %p196 = por %p194, %p195
      %p197 = scmp.ne.s32.totalorder %s189, %s192
      %p198 = scmp.eq.s32.totalorder %s20, 0
      %p199 = por %p197, %p198
      %p200 = scmp.ne.s32.totalorder %s189, %s192
      %p201 = scmp.eq.s32.totalorder %s25, 7
      %p202 = por %p200, %p201
      %p203 = scmp.ne.s32.totalorder %s192, %s193
      %p204 = scmp.eq.s32.totalorder %s25, 0
      %p205 = por %p203, %p204
      %p206 = scmp.ne.s32.totalorder %s192, %s193
      %p207 = scmp.eq.s32.totalorder %s26, 7
      %p208 = por %p206, %p207
      %p210 = scmp.ne.s32.totalorder %s193, %s209
      %p211 = scmp.eq.s32.totalorder %s26, 0
      %p212 = por %p210, %p211
      %p213 = scmp.le.s32.totalorder 1, %s20
      %p214 = scmp.lt.s32.totalorder %s20, 9
      %p215 = pnand %p213, %p214
      %p216 = pneg %p215
      // Predicated region
      $region9: #{autorec_forward.1} parent=5 // pred_check
        _
      $region10: #{autorec_forward.1} parent=5 // pred_check_branch
        %218 = sbr.rel (%p215) target = $region12
      $region11: #{autorec_forward.1} parent=5 // pred_region
        %s219 = ssub.s32 %s20, 1
        // Predicated region
        $region13: #{autorec_forward.1} parent=11 // pred_check
          %p220 = pneg %p121
        $region14: #{autorec_forward.1} parent=11 // pred_check_branch
          %222 = sbr.rel (%p220) target = $region16
        $region15: #{autorec_forward.1} parent=11 // pred_region
          _
        $region16: #{autorec_forward.1} parent=11 // pred_fallthru
          _
      $region12: #{autorec_forward.1} parent=5 // pred_fallthru
        _
      %p223 = scmp.lt.s32.totalorder %s20, 8
      // Predicated region
      $region17: #{autorec_forward.1} parent=5 // pred_check
        %p224 = pneg %p223
      $region18: #{autorec_forward.1} parent=5 // pred_check_branch
        %226 = sbr.rel (%p224) target = $region20
      $region19: #{autorec_forward.1} parent=5 // pred_region
        // Predicated region
        $region21: #{autorec_forward.1} parent=19 // pred_check
          %p227 = pneg %p60
        $region22: #{autorec_forward.1} parent=19 // pred_check_branch
          %229 = sbr.rel (%p227) target = $region24
        $region23: #{autorec_forward.1} parent=19 // pred_region
          %s230 = ssub.s32 1, %s27
          %s231 = smul.u32 %s28, %s230
          %s232 = smul.u32 %s27, 3
          %s233 = sadd.s32 %s231, %s232
          %s234 = smul.u32 2, %s233
          %p235 = scmp.lt.s32.totalorder %s234, 7
          %s236 = scalar_select %p235, %s234, 7
          %s237 = smul.addr %s236, 8
          %s238 = scalar_lea.vmem %s0, %s237
          %s239 = ssub.s32 1, %s27
          %s240 = smul.u32 %s28, %s239
          %s241 = smul.u32 %s27, 3
          %s242 = sadd.s32 %s240, %s241
          %s243 = smul.u32 2, %s242
        $region24: #{autorec_forward.1} parent=19 // pred_fallthru
          _
        // Predicated region
        $region25: #{autorec_forward.1} parent=19 // pred_check
          %p244 = pneg %p94
        $region26: #{autorec_forward.1} parent=19 // pred_check_branch
          %246 = sbr.rel (%p244) target = $region28
        $region27: #{autorec_forward.1} parent=19 // pred_region
          %s247 = sand.u32 %s84, 1
          %s248 = scalar_lea.sflag [#allocation5], %s247
          %s249 = sand.u32 %s84, 1
          %s250 = smul.addr %s249, 128
          %s251 = scalar_lea.vmem [#allocation4], %s250
          %s252 = ssub.s32 1, %s27
          %s253 = smul.u32 %s28, %s252
          %s254 = smul.u32 %s27, 3
          %s255 = sadd.s32 %s253, %s254
          %s256 = smul.u32 32, %s255
          %258 = vsyncadd %s248, 0
          %s259 = smul.addr %s256, 4
          %s260 = scalar_lea.hbm %s1, %s259
          %s261 = sshll.u32 %s260, 4
          %s262 = int_to_ptr.hbm [resolvable:$true] %s261
          %s263 = sshll.u32 %s251, 4
          %s264 = int_to_ptr.vmem [resolvable:$true] %s263
          %269 = dma.hbm_to_vmem [thread:$0]  %s262, 2048, %s264, %s248, 64, 64, 4
        $region28: #{autorec_forward.1} parent=19 // pred_fallthru
          _
        // Predicated region
        $region29: #{autorec_forward.1} parent=19 // pred_check
          %p270 = pneg %p143
        $region30: #{autorec_forward.1} parent=19 // pred_check_branch
          %272 = sbr.rel (%p270) target = $region32
        $region31: #{autorec_forward.1} parent=19 // pred_region
          %s273 = sand.u32 %s133, 1
          %s274 = scalar_lea.sflag [#allocation8], %s273
          %s275 = sand.u32 %s133, 1
          %s276 = smul.addr %s275, 128
          %s277 = scalar_lea.vmem [#allocation7], %s276
          %s278 = smul.u32 %s28, %s27
          %s279 = smul.u32 32, %s278
          %281 = vsyncadd %s274, 0
          %s282 = smul.addr %s279, 4
          %s283 = scalar_lea.hbm %s3, %s282
          %s284 = sshll.u32 %s283, 4
          %s285 = int_to_ptr.hbm [resolvable:$true] %s284
          %s286 = sshll.u32 %s277, 4
          %s287 = int_to_ptr.vmem [resolvable:$true] %s286
          %292 = dma.hbm_to_vmem [thread:$0]  %s285, 2048, %s287, %s274, 64, 64, 4
        $region32: #{autorec_forward.1} parent=19 // pred_fallthru
          _
        // Predicated region
        $region33: #{autorec_forward.1} parent=19 // pred_check
          %p293 = pneg %p171
        $region34: #{autorec_forward.1} parent=19 // pred_check_branch
          %295 = sbr.rel (%p293) target = $region36
        $region35: #{autorec_forward.1} parent=19 // pred_region
          %s296 = smul.u32 %s28, %s27
          %s297 = smul.u32 2, %s296
          %p298 = scmp.lt.s32.totalorder %s297, 7
          %s299 = scalar_select %p298, %s297, 7
          %s300 = scalar_lea.vmem %s4, %s299
          %s301 = smul.u32 %s28, %s27
          %s302 = smul.u32 2, %s301
        $region36: #{autorec_forward.1} parent=19 // pred_fallthru
          _
      $region20: #{autorec_forward.1} parent=5 // pred_fallthru
        _
      %p303 = scmp.le.s32.totalorder 1, %s20
      %p304 = scmp.lt.s32.totalorder %s20, 9
      %p305 = pnand %p303, %p304
      %p306 = pneg %p305
      // Predicated region
      $region37: #{autorec_forward.1} parent=5 // pred_check
        _
      $region38: #{autorec_forward.1} parent=5 // pred_check_branch
        %308 = sbr.rel (%p305) target = $region40
      $region39: #{autorec_forward.1} parent=5 // pred_region
        %s309 = ssub.s32 %s20, 1
        %s310 = sand.u32 %s87, 1
        %s311 = scalar_lea.sflag [#allocation5], %s310
        %s312 = sand.u32 %s87, 1
        %s313 = smul.addr %s312, 128
        %s314 = scalar_lea.vmem [#allocation4], %s313
        // Predicated region
        $region41: #{autorec_forward.1} parent=39 // pred_check
          %p315 = pneg %p100
        $region42: #{autorec_forward.1} parent=39 // pred_check_branch
          %317 = sbr.rel (%p315) target = $region44
        $region43: #{autorec_forward.1} parent=39 // pred_region
          %319 = dma.done %s311, 2048
        $region44: #{autorec_forward.1} parent=39 // pred_fallthru
          _
        %s320 = sand.u32 %s136, 1
        %s321 = scalar_lea.sflag [#allocation8], %s320
        %s322 = sand.u32 %s136, 1
        %s323 = smul.addr %s322, 128
        %s324 = scalar_lea.vmem [#allocation7], %s323
        // Predicated region
        $region45: #{autorec_forward.1} parent=39 // pred_check
          %p325 = pneg %p149
        $region46: #{autorec_forward.1} parent=39 // pred_check_branch
          %327 = sbr.rel (%p325) target = $region48
        $region47: #{autorec_forward.1} parent=39 // pred_region
          %329 = dma.done %s321, 2048
        $region48: #{autorec_forward.1} parent=39 // pred_fallthru
          _
        %s330 = ssub.s32 1, %s29
        %s331 = smul.u32 %s30, %s330
        %s332 = smul.u32 %s29, 3
        %s333 = sadd.s32 %s331, %s332
        %s334 = smul.u32 2, %s333
        %p335 = scmp.lt.s32.totalorder %s334, 7
        %s336 = scalar_select %p335, %s334, 7
        %s337 = smul.addr %s336, 8
        %s338 = scalar_lea.vmem %s0, %s337
        %p339 = pneg %p66
        %p340 = pneg %p63
        %s341 = sand.u32 %s87, 1
        %s342 = scalar_lea.sflag [#allocation5], %s341
        %s343 = sand.u32 %s87, 1
        %s344 = smul.addr %s343, 128
        %s345 = scalar_lea.vmem [#allocation4], %s344
        %p346 = pneg %p100
        %p347 = pneg %p97
        %p348 = pneg %p121
        %p349 = pneg %p118
        %s350 = sand.u32 %s136, 1
        %s351 = scalar_lea.sflag [#allocation8], %s350
        %s352 = sand.u32 %s136, 1
        %s353 = smul.addr %s352, 128
        %s354 = scalar_lea.vmem [#allocation7], %s353
        %p355 = pneg %p149
        %p356 = pneg %p146
        %s357 = smul.u32 %s30, %s29
        %s358 = smul.u32 2, %s357
        %p359 = scmp.lt.s32.totalorder %s358, 7
        %s360 = scalar_select %p359, %s358, 7
        %s361 = scalar_lea.vmem %s4, %s360
        %p362 = pneg %p177
        %p363 = pneg %p174
        %p364 = pneg %p205
        %p365 = pneg %p202
        %s366 = sand.u32 %s192, 1
        %s367 = scalar_lea.sflag [#allocation6], %s366
        %s368 = sand.u32 %s192, 1
        %s369 = smul.addr %s368, 16
        %s370 = scalar_lea.vmem [#allocation9], %s369
        %s371 = ssub.s32 1, %s29
        %s372 = smul.u32 %s30, %s371
        %s373 = smul.u32 %s29, 3
        %s374 = sadd.s32 %s372, %s373
        %s375 = smul.u32 2, %s374
        %p376 = scmp.lt.s32.totalorder %s375, 7
        %s377 = scalar_select %p376, %s375, 7
        %s378 = smul.addr %s377, 8
        %s379 = scalar_lea.vmem %s0, %s378
        %s380 = ssub.s32 1, %s29
        %s381 = smul.u32 %s30, %s380
        %s382 = smul.u32 %s29, 3
        %s383 = sadd.s32 %s381, %s382
        %s384 = smul.u32 2, %s383
        %s385 = ssub.s32 1, %s29
        %s386 = smul.u32 %s30, %s385
        %s387 = smul.u32 %s29, 3
        %s388 = sadd.s32 %s386, %s387
        %s389 = smul.u32 32, %s388
        %s390 = smul.u32 %s30, %s29
        %s391 = smul.u32 32, %s390
        %s392 = smul.u32 %s30, %s29
        %s393 = smul.u32 2, %s392
        %p394 = scmp.lt.s32.totalorder %s393, 7
        %s395 = scalar_select %p394, %s393, 7
        %s396 = scalar_lea.vmem %s4, %s395
        %s397 = smul.u32 %s30, %s29
        %s398 = smul.u32 2, %s397
        %s399 = smul.u32 %s30, %s29
        %s400 = smul.u32 2, %s399
        %p401 = scmp.eq.s32.totalorder %s29, 0
        %p402 = scmp.eq.s32.totalorder %s30, 0
        %p403 = pnand %p401, %p402
        %p404 = pneg %p403
        // Predicated region
        $region49: #{autorec_forward.1} parent=39 // pred_check
          _
        $region50: #{autorec_forward.1} parent=39 // pred_check_branch
          %406 = sbr.rel (%p403) target = $region52
        $region51: #{autorec_forward.1} parent=39 // pred_region
          %407 = vst [vmem:[#allocation2] sm:$0xff] 0.0
        $region52: #{autorec_forward.1} parent=39 // pred_fallthru
          _
        // Predicated region
        $region53: #{autorec_forward.1} parent=39 // pred_check
          %p408 = pneg %p401
        $region54: #{autorec_forward.1} parent=39 // pred_check_branch
          %410 = sbr.rel (%p408) target = $region56
        $region55: #{autorec_forward.1} parent=39 // pred_region
          %v411 = vld [vmem:[#allocation2] sm:$0xff]
          %v412 = vld [vmem:[%s379] sm:$0xff]
          %v413 = vld [vmem:[%s379 + $0x8] sm:$0xff]
          %v414 = vpack.c.bf16 %v412, %v412
          %v415 = vpack.c.bf16 %v413, %v413
          %v416 = vld [vmem:[%s314] sm:$0xf]
          %v417 = vld [vmem:[%s314 + $0x4] sm:$0xf]
          %v418 = vld [vmem:[%s314 + $0x8] sm:$0xf]
          %v419 = vld [vmem:[%s314 + $0xc] sm:$0xf]
          %v420 = vld [vmem:[%s314 + $0x10] sm:$0xf]
          %v421 = vld [vmem:[%s314 + $0x14] sm:$0xf]
          %v422 = vld [vmem:[%s314 + $0x18] sm:$0xf]
          %v423 = vld [vmem:[%s314 + $0x1c] sm:$0xf]
          %v424 = vld [vmem:[%s314 + $0x20] sm:$0xf]
          %v425 = vld [vmem:[%s314 + $0x24] sm:$0xf]
          %v426 = vld [vmem:[%s314 + $0x28] sm:$0xf]
          %v427 = vld [vmem:[%s314 + $0x2c] sm:$0xf]
          %v428 = vld [vmem:[%s314 + $0x30] sm:$0xf]
          %v429 = vld [vmem:[%s314 + $0x34] sm:$0xf]
          %v430 = vld [vmem:[%s314 + $0x38] sm:$0xf]
          %v431 = vld [vmem:[%s314 + $0x3c] sm:$0xf]
          %v432 = vld [vmem:[%s314 + $0x40] sm:$0xf]
          %v433 = vld [vmem:[%s314 + $0x44] sm:$0xf]
          %v434 = vld [vmem:[%s314 + $0x48] sm:$0xf]
          %v435 = vld [vmem:[%s314 + $0x4c] sm:$0xf]
          %v436 = vld [vmem:[%s314 + $0x50] sm:$0xf]
          %v437 = vld [vmem:[%s314 + $0x54] sm:$0xf]
          %v438 = vld [vmem:[%s314 + $0x58] sm:$0xf]
          %v439 = vld [vmem:[%s314 + $0x5c] sm:$0xf]
          %v440 = vld [vmem:[%s314 + $0x60] sm:$0xf]
          %v441 = vld [vmem:[%s314 + $0x64] sm:$0xf]
          %v442 = vld [vmem:[%s314 + $0x68] sm:$0xf]
          %v443 = vld [vmem:[%s314 + $0x6c] sm:$0xf]
          %v444 = vld [vmem:[%s314 + $0x70] sm:$0xf]
          %v445 = vld [vmem:[%s314 + $0x74] sm:$0xf]
          %v446 = vld [vmem:[%s314 + $0x78] sm:$0xf]
          %v447 = vld [vmem:[%s314 + $0x7c] sm:$0xf]
          %v480 = vunpack.c.l.b16 %v416
          %v481 = vunpack.c.l.b16 %v417
          %v482 = vunpack.c.l.b16 %v418
          %v483 = vunpack.c.l.b16 %v419
          %v484 = vunpack.c.l.b16 %v420
          %v485 = vunpack.c.l.b16 %v421
          %v486 = vunpack.c.l.b16 %v422
          %v487 = vunpack.c.l.b16 %v423
          %v488 = vunpack.c.l.b16 %v424
          %v489 = vunpack.c.l.b16 %v425
          %v490 = vunpack.c.l.b16 %v426
          %v491 = vunpack.c.l.b16 %v427
          %v492 = vunpack.c.l.b16 %v428
          %v493 = vunpack.c.l.b16 %v429
          %v494 = vunpack.c.l.b16 %v430
          %v495 = vunpack.c.l.b16 %v431
          %v496 = vunpack.c.l.b16 %v432
          %v497 = vunpack.c.l.b16 %v433
          %v498 = vunpack.c.l.b16 %v434
          %v499 = vunpack.c.l.b16 %v435
          %v500 = vunpack.c.l.b16 %v436
          %v501 = vunpack.c.l.b16 %v437
          %v502 = vunpack.c.l.b16 %v438
          %v503 = vunpack.c.l.b16 %v439
          %v504 = vunpack.c.l.b16 %v440
          %v505 = vunpack.c.l.b16 %v441
          %v506 = vunpack.c.l.b16 %v442
          %v507 = vunpack.c.l.b16 %v443
          %v508 = vunpack.c.l.b16 %v444
          %v509 = vunpack.c.l.b16 %v445
          %v510 = vunpack.c.l.b16 %v446
          %v511 = vunpack.c.l.b16 %v447
          %v512 = vpack.c.b16 %v481, %v480
          %v513 = vpack.c.b16 %v483, %v482
          %v514 = vpack.c.b16 %v485, %v484
          %v515 = vpack.c.b16 %v487, %v486
          %v516 = vpack.c.b16 %v489, %v488
          %v517 = vpack.c.b16 %v491, %v490
          %v518 = vpack.c.b16 %v493, %v492
          %v519 = vpack.c.b16 %v495, %v494
          %v520 = vpack.c.b16 %v497, %v496
          %v521 = vpack.c.b16 %v499, %v498
          %v522 = vpack.c.b16 %v501, %v500
          %v523 = vpack.c.b16 %v503, %v502
          %v524 = vpack.c.b16 %v505, %v504
          %v525 = vpack.c.b16 %v507, %v506
          %v526 = vpack.c.b16 %v509, %v508
          %v527 = vpack.c.b16 %v511, %v510
          %544 = vmatpush.bf16.msra.mxu0 %v519
          %545 = vmatpush.bf16.msra.mxu0 %v518
          %546 = vmatpush.bf16.msra.mxu0 %v517
          %547 = vmatpush.bf16.msra.mxu0 %v516
          %548 = vmatpush.bf16.msra.mxu0 %v515
          %549 = vmatpush.bf16.msra.mxu0 %v514
          %550 = vmatpush.bf16.msra.mxu0 %v513
          %551 = vmatpush.bf16.msra.mxu0 %v512
          %552 = vmatmul.bf16.gmra.mxu0 %v414
          %v553 = vpop.f32.mrf.mxu0
          %v554 = vadd.f32 0.0, %v553
          %v555 = vpop.f32.mrf.mxu0
          %556 = vdwg.mxu0
          %557 = vmatpush.bf16.msra.mxu0 %v527
          %558 = vmatpush.bf16.msra.mxu0 %v526
          %559 = vmatpush.bf16.msra.mxu0 %v525
          %560 = vmatpush.bf16.msra.mxu0 %v524
          %561 = vmatpush.bf16.msra.mxu0 %v523
          %562 = vmatpush.bf16.msra.mxu0 %v522
          %563 = vmatpush.bf16.msra.mxu0 %v521
          %564 = vmatpush.bf16.msra.mxu0 %v520
          %565 = vmatmul.bf16.gmra.mxu0 %v415
          %v566 = vpop.f32.mrf.mxu0
          %v567 = vadd.f32 %v554, %v566
          %v568 = vpop.f32.mrf.mxu0
          %569 = vdwg.mxu0
          %v570 = vadd.f32 %v411, %v567
          %571 = vst [vmem:[#allocation2] sm:$0xff] %v570
        $region56: #{autorec_forward.1} parent=39 // pred_fallthru
          _
        %p572 = scmp.eq.s32.totalorder %s29, 1
        // Predicated region
        $region57: #{autorec_forward.1} parent=39 // pred_check
          %p573 = pneg %p572
        $region58: #{autorec_forward.1} parent=39 // pred_check_branch
          %575 = sbr.rel (%p573) target = $region60
        $region59: #{autorec_forward.1} parent=39 // pred_region
          // Predicated region
          $region61: #{autorec_forward.1} parent=59 // pred_check
            %p576 = pneg %p402
          $region62: #{autorec_forward.1} parent=59 // pred_check_branch
            %578 = sbr.rel (%p576) target = $region64
          $region63: #{autorec_forward.1} parent=59 // pred_region
            %v579 = vld [vmem:[#allocation2] sm:$0xff]
            %v580 = vld [vmem:[%s2] sm:$0x1]
            %v582 = vperm.slane %v580, 0
            %v584 = vadd.f32 %v579, %v582
            %v585 = vmax.f32 %v584, 0.0
            %v586 = vpack.c.bf16 %v585, %v585
            %587 = vst [vmem:[#allocation3] sm:$0xf] %v586
          $region64: #{autorec_forward.1} parent=59 // pred_fallthru
            _
          %v588 = vld [vmem:[#allocation3] sm:$0xf]
          %v589 = vld [vmem:[%s324] sm:$0xf]
          %v590 = vld [vmem:[%s324 + $0x4] sm:$0xf]
          %v591 = vld [vmem:[%s324 + $0x8] sm:$0xf]
          %v592 = vld [vmem:[%s324 + $0xc] sm:$0xf]
          %v593 = vld [vmem:[%s324 + $0x10] sm:$0xf]
          %v594 = vld [vmem:[%s324 + $0x14] sm:$0xf]
          %v595 = vld [vmem:[%s324 + $0x18] sm:$0xf]
          %v596 = vld [vmem:[%s324 + $0x1c] sm:$0xf]
          %v597 = vld [vmem:[%s324 + $0x20] sm:$0xf]
          %v598 = vld [vmem:[%s324 + $0x24] sm:$0xf]
          %v599 = vld [vmem:[%s324 + $0x28] sm:$0xf]
          %v600 = vld [vmem:[%s324 + $0x2c] sm:$0xf]
          %v601 = vld [vmem:[%s324 + $0x30] sm:$0xf]
          %v602 = vld [vmem:[%s324 + $0x34] sm:$0xf]
          %v603 = vld [vmem:[%s324 + $0x38] sm:$0xf]
          %v604 = vld [vmem:[%s324 + $0x3c] sm:$0xf]
          %v605 = vld [vmem:[%s324 + $0x40] sm:$0xf]
          %v606 = vld [vmem:[%s324 + $0x44] sm:$0xf]
          %v607 = vld [vmem:[%s324 + $0x48] sm:$0xf]
          %v608 = vld [vmem:[%s324 + $0x4c] sm:$0xf]
          %v609 = vld [vmem:[%s324 + $0x50] sm:$0xf]
          %v610 = vld [vmem:[%s324 + $0x54] sm:$0xf]
          %v611 = vld [vmem:[%s324 + $0x58] sm:$0xf]
          %v612 = vld [vmem:[%s324 + $0x5c] sm:$0xf]
          %v613 = vld [vmem:[%s324 + $0x60] sm:$0xf]
          %v614 = vld [vmem:[%s324 + $0x64] sm:$0xf]
          %v615 = vld [vmem:[%s324 + $0x68] sm:$0xf]
          %v616 = vld [vmem:[%s324 + $0x6c] sm:$0xf]
          %v617 = vld [vmem:[%s324 + $0x70] sm:$0xf]
          %v618 = vld [vmem:[%s324 + $0x74] sm:$0xf]
          %v619 = vld [vmem:[%s324 + $0x78] sm:$0xf]
          %v620 = vld [vmem:[%s324 + $0x7c] sm:$0xf]
          %v621 = vld [vmem:[%s396] sm:$0x3]
          %v623 = vperm.slane %v621, 0
          %v624 = vperm.slane %v621, 1
          %v659 = vunpack.c.l.b16 %v589
          %v660 = vunpack.c.l.b16 %v590
          %v661 = vunpack.c.l.b16 %v591
          %v662 = vunpack.c.l.b16 %v592
          %v663 = vunpack.c.l.b16 %v593
          %v664 = vunpack.c.l.b16 %v594
          %v665 = vunpack.c.l.b16 %v595
          %v666 = vunpack.c.l.b16 %v596
          %v667 = vunpack.c.l.b16 %v597
          %v668 = vunpack.c.l.b16 %v598
          %v669 = vunpack.c.l.b16 %v599
          %v670 = vunpack.c.l.b16 %v600
          %v671 = vunpack.c.l.b16 %v601
          %v672 = vunpack.c.l.b16 %v602
          %v673 = vunpack.c.l.b16 %v603
          %v674 = vunpack.c.l.b16 %v604
          %v675 = vunpack.c.l.b16 %v605
          %v676 = vunpack.c.l.b16 %v606
          %v677 = vunpack.c.l.b16 %v607
          %v678 = vunpack.c.l.b16 %v608
          %v679 = vunpack.c.l.b16 %v609
          %v680 = vunpack.c.l.b16 %v610
          %v681 = vunpack.c.l.b16 %v611
          %v682 = vunpack.c.l.b16 %v612
          %v683 = vunpack.c.l.b16 %v613
          %v684 = vunpack.c.l.b16 %v614
          %v685 = vunpack.c.l.b16 %v615
          %v686 = vunpack.c.l.b16 %v616
          %v687 = vunpack.c.l.b16 %v617
          %v688 = vunpack.c.l.b16 %v618
          %v689 = vunpack.c.l.b16 %v619
          %v690 = vunpack.c.l.b16 %v620
          %v691 = vpack.c.b16 %v660, %v659
          %v692 = vpack.c.b16 %v662, %v661
          %v693 = vpack.c.b16 %v664, %v663
          %v694 = vpack.c.b16 %v666, %v665
          %v695 = vpack.c.b16 %v668, %v667
          %v696 = vpack.c.b16 %v670, %v669
          %v697 = vpack.c.b16 %v672, %v671
          %v698 = vpack.c.b16 %v674, %v673
          %v699 = vpack.c.b16 %v676, %v675
          %v700 = vpack.c.b16 %v678, %v677
          %v701 = vpack.c.b16 %v680, %v679
          %v702 = vpack.c.b16 %v682, %v681
          %v703 = vpack.c.b16 %v684, %v683
          %v704 = vpack.c.b16 %v686, %v685
          %v705 = vpack.c.b16 %v688, %v687
          %v706 = vpack.c.b16 %v690, %v689
          %723 = vmatpush.bf16.xpose.msra.mxu0 %v698
          %724 = vmatpush.bf16.xpose.msra.mxu0 %v697
          %725 = vmatpush.bf16.xpose.msra.mxu0 %v696
          %726 = vmatpush.bf16.xpose.msra.mxu0 %v695
          %727 = vmatpush.bf16.xpose.msra.mxu0 %v694
          %728 = vmatpush.bf16.xpose.msra.mxu0 %v693
          %729 = vmatpush.bf16.xpose.msra.mxu0 %v692
          %730 = vmatpush.bf16.xpose.msra.mxu0 %v691
          %731 = vmatmul.bf16.gmra.mxu0 %v588
          %v732 = vpop.f32.mrf.mxu0
          %v733 = vadd.f32 %v623, %v732
          %v734 = vpop.f32.mrf.mxu0
          %735 = vdwg.mxu0
          %736 = vmatpush.bf16.xpose.msra.mxu0 %v706
          %737 = vmatpush.bf16.xpose.msra.mxu0 %v705
          %738 = vmatpush.bf16.xpose.msra.mxu0 %v704
          %739 = vmatpush.bf16.xpose.msra.mxu0 %v703
          %740 = vmatpush.bf16.xpose.msra.mxu0 %v702
          %741 = vmatpush.bf16.xpose.msra.mxu0 %v701
          %742 = vmatpush.bf16.xpose.msra.mxu0 %v700
          %743 = vmatpush.bf16.xpose.msra.mxu0 %v699
          %744 = vmatmul.bf16.gmra.mxu0 %v588
          %v745 = vpop.f32.mrf.mxu0
          %v746 = vadd.f32 %v624, %v745
          %v747 = vpop.f32.mrf.mxu0
          %748 = vdwg.mxu0
          %749 = vst [vmem:[%s370] sm:$0xff] %v733
          %750 = vst [vmem:[%s370 + $0x8] sm:$0xff] %v746
        $region60: #{autorec_forward.1} parent=39 // pred_fallthru
          _
        %s751 = sand.u32 %s192, 1
        %s752 = scalar_lea.sflag [#allocation6], %s751
        %s753 = sand.u32 %s192, 1
        %s754 = smul.addr %s753, 16
        %s755 = scalar_lea.vmem [#allocation9], %s754
        // Predicated region
        $region65: #{autorec_forward.1} parent=39 // pred_check
          %p756 = pneg %p202
        $region66: #{autorec_forward.1} parent=39 // pred_check_branch
          %758 = sbr.rel (%p756) target = $region68
        $region67: #{autorec_forward.1} parent=39 // pred_region
          %s759 = smul.u32 %s30, %s29
          %s760 = smul.u32 2, %s759
          %762 = vsyncadd %s752, 0
          %s763 = smul.addr %s760, 8
          %s764 = scalar_lea.hbm %s5, %s763
          %s766 = sshll.u32 %s755, 4
          %s767 = int_to_ptr.vmem [resolvable:$true] %s766
          %s768 = sshll.u32 %s764, 4
          %s769 = int_to_ptr.hbm [resolvable:$true] %s768
          %771 = dma.vmem_to_hbm [thread:$0]  %s767, 256, %s769, %s752
        $region68: #{autorec_forward.1} parent=39 // pred_fallthru
          _
      $region40: #{autorec_forward.1} parent=5 // pred_fallthru
        _
      %p772 = scmp.le.s32.totalorder 2, %s20
      // Predicated region
      $region69: #{autorec_forward.1} parent=5 // pred_check
        %p773 = pneg %p772
      $region70: #{autorec_forward.1} parent=5 // pred_check_branch
        %775 = sbr.rel (%p773) target = $region72
      $region71: #{autorec_forward.1} parent=5 // pred_region
        %s776 = ssub.s32 %s20, 2
        // Predicated region
        $region73: #{autorec_forward.1} parent=71 // pred_check
          %p777 = pneg %p208
        $region74: #{autorec_forward.1} parent=71 // pred_check_branch
          %779 = sbr.rel (%p777) target = $region76
        $region75: #{autorec_forward.1} parent=71 // pred_region
          %s780 = sand.u32 %s193, 1
          %s781 = scalar_lea.sflag [#allocation6], %s780
          %s782 = sand.u32 %s193, 1
          %s783 = smul.addr %s782, 16
          %s784 = scalar_lea.vmem [#allocation9], %s783
          %786 = dma.done %s781, 256
        $region76: #{autorec_forward.1} parent=71 // pred_fallthru
          _
      $region72: #{autorec_forward.1} parent=5 // pred_fallthru
        _
    $region6: #{autorec_forward.1} parent=1 // loop_footer
      %s24 = sadd.s32 1, %s20
    $region7: #{autorec_forward.1} parent=1 // loop_footer_branch
      %19 = sbr.rel target = $region3
    $region8: #{autorec_forward.1} parent=1 // loop_exit
      _
    %787 = vsyncpa [#allocation5], 1
    %s788 = scalar_lea.sflag [#allocation5], 1
    %789 = vsyncpa %s788, 1
    %790 = vsyncpa [#allocation8], 1
    %s791 = scalar_lea.sflag [#allocation8], 1
    %792 = vsyncpa %s791, 1
    %793 = vsyncpa [#allocation6], 1
    %s794 = scalar_lea.sflag [#allocation6], 1
    %795 = vsyncpa %s794, 1

</llo_original>
